<compile_context>
chip_gen: v7x
topology: tpu7x:2x2x1
jax: 0.10.0
libtpu: 0.0.40
codegen_flags: <defaults>
</compile_context>

<pallas_src>
import math

import jax
import jax.numpy as jnp
from jax import lax
from jax.experimental import pallas as pl
from jax.experimental.pallas import tpu as pltpu

S_SCALE = 30.0
MARGIN = 0.5
EPS = 1e-12   # F.normalize default: v / max(||v||, eps)


def _addmargin_kernel(label_ref, x_ref, w_ref, out_ref):
    # label_ref: (B, 1)  int32    (resident across the C grid)
    # x_ref:     (B, D)  float32  (resident across the C grid)
    # w_ref:     (TC, D) bfloat16 (streamed weight tile)
    # out_ref:   (B, TC) float32
    x = x_ref[...]
    w = w_ref[...]
    lbl = label_ref[...]

    # Inverse L2 norms of the input rows (exact F.normalize semantics),
    # computed from the full-precision f32 activations.  Cheap (B*D VPU +
    # EUP work) and fully hidden under the weight-stream DMA.
    inv_x = 1.0 / jnp.maximum(
        jnp.sqrt(jnp.sum(x * x, axis=-1, keepdims=True)), EPS)        # (B, 1)

    # Row-sums of W^2 for this tile, landed lane-oriented via a tiny
    # ones-matvec on the MXU (avoids a (TC,1)->(1,TC) relayout/transpose).
    # Squares are taken in f32 so the normalization factor keeps full
    # precision even though the matmul operands are bf16.
    w_f32 = w.astype(jnp.float32)
    d = w_f32.shape[1]
    w_sq_rows = lax.dot_general(
        jnp.ones((8, d), jnp.float32), w_f32 * w_f32,
        dimension_numbers=(((1,), (1,)), ((), ())),
        preferred_element_type=jnp.float32)                           # (8, TC)
    inv_w = 1.0 / jnp.maximum(jnp.sqrt(w_sq_rows[0:1, :]), EPS)       # (1, TC)

    # Un-normalized logits: bf16 operands on the MXU, f32 accumulation,
    # contracting the last dims directly (no .T on the big weight tile).
    raw = lax.dot_general(
        x.astype(jnp.bfloat16), w,
        dimension_numbers=(((1,), (1,)), ((), ())),
        preferred_element_type=jnp.float32)                           # (B, TC)

    cosine = raw * inv_x * inv_w                                      # (B, TC)

    # Margin on the target class, using this tile's *global* column offset.
    B, TC = out_ref.shape
    col0 = pl.program_id(0) * TC
    cls_ids = col0 + lax.broadcasted_iota(jnp.int32, (B, TC), dimension=1)
    # s * (one_hot*(cos - m) + (1 - one_hot)*cos) == s * where(hit, cos - m, cos)
    out_ref[...] = (S_SCALE * jnp.where(cls_ids == lbl,
                                        cosine - MARGIN,
                                        cosine)).astype(out_ref.dtype)


def _choose_tile_c(C, D, B, vmem_budget_bytes=8 * 1024 * 1024):
    """Largest multiple of 128 that divides C whose per-step VMEM footprint
    (double-buffered bf16 weight tile + double-buffered f32 output tile)
    stays inside a conservative budget, leaving headroom under the default
    scoped-VMEM limit on every generation (including v7x's 64 MiB)."""
    if C % 128 != 0:
        return C   # fall back to a single full-extent block
    best = 128
    t = 128
    while t <= C:
        if C % t == 0:
            per_step = 2 * (t * D * 2) + 2 * (B * t * 4)
            if per_step <= vmem_budget_bytes:
                best = t
        t += 128
    return best


def add_margin_product(x, weight, label, *, tile_c=None):
    """x: (B, D) f32, weight: (C, D) f32 (streamed as bf16), label: (B,) int.
    Returns (B, C) f32 CosFace logits."""
    B, D = x.shape
    C, D2 = weight.shape
    assert D == D2
    label2d = label.reshape(B, 1).astype(jnp.int32)
    # Halve HBM bytes on the dominant (weight) stream; accumulation stays f32
    # in-kernel and the normalization factors are computed from f32 values.
    w_bf16 = weight.astype(jnp.bfloat16)

    TC = tile_c if tile_c is not None else _choose_tile_c(C, D, B)
    assert C % TC == 0, f"out_features={C} must be divisible by tile_c={TC}"
    grid = (C // TC,)

    return pl.pallas_call(
        _addmargin_kernel,
        out_shape=jax.ShapeDtypeStruct((B, C), jnp.float32),
        grid_spec=pltpu.PrefetchScalarGridSpec(
            num_scalar_prefetch=0,
            grid=grid,
            in_specs=[
                pl.BlockSpec((B, 1), lambda j: (0, 0)),    # label (resident)
                pl.BlockSpec((B, D), lambda j: (0, 0)),    # x (resident)
                pl.BlockSpec((TC, D), lambda j: (j, 0)),   # weight tile (streamed)
            ],
            out_specs=pl.BlockSpec((B, TC), lambda j: (0, j)),
        ),
        compiler_params=pltpu.CompilerParams(
            # C tiles are independent -> shard across both TCs on v7x megacore.
            dimension_semantics=("parallel",),
        ),
    )(label2d, x, w_bf16)


def xavier_uniform(key, shape):
    # nn.init.xavier_uniform_ for a (out_features, in_features) weight
    fan_out, fan_in = shape
    bound = math.sqrt(6.0 / (fan_in + fan_out))
    return jax.random.uniform(key, shape, jnp.float32, -bound, bound)


if __name__ == "__main__":
    B = 8
    IN_FEATURES = 64
    OUT_FEATURES = 256

    key = jax.random.PRNGKey(0)
    kx, kw, kl = jax.random.split(key, 3)

    x = jax.random.normal(kx, (B, IN_FEATURES), jnp.float32)
    weight = xavier_uniform(kw, (OUT_FEATURES, IN_FEATURES))
    label = jax.random.randint(kl, (B,), 0, OUT_FEATURES, jnp.int32)

    # tile_c=128 -> grid=(2,): exercises the streamed-weight / offset-margin path.
    out = add_margin_product(x, weight, label, tile_c=128)
    out = jax.block_until_ready(out)

    # Pure-JAX reference with the same numerics the kernel uses: bf16-rounded
    # operands on the matmul, f32 accumulation, f32 normalization factors.
    xq = x.astype(jnp.bfloat16).astype(jnp.float32)
    wq = weight.astype(jnp.bfloat16).astype(jnp.float32)
    inv_x = 1.0 / jnp.maximum(jnp.linalg.norm(x, axis=-1, keepdims=True), EPS)
    inv_w = 1.0 / jnp.maximum(jnp.linalg.norm(wq, axis=-1, keepdims=True), EPS)
    cosine = (xq @ wq.T) * inv_x * inv_w.T
    one_hot = jax.nn.one_hot(label, OUT_FEATURES, dtype=jnp.float32)
    ref = S_SCALE * (one_hot * (cosine - MARGIN) + (1.0 - one_hot) * cosine)

    max_err = jnp.max(jnp.abs(out - ref))
    assert jnp.allclose(out, ref, atol=2e-2, rtol=1e-3), f"max abs err {max_err}"

    # Sanity against the exact f32 PyTorch math (only bf16 input rounding differs).
    x_n = x * inv_x
    w_n = weight / jnp.maximum(jnp.linalg.norm(weight, axis=-1, keepdims=True), EPS)
    ref_f32 = S_SCALE * ((x_n @ w_n.T) - MARGIN * one_hot)
    assert jnp.max(jnp.abs(out - ref_f32)) < 2e-1

    print("KERNEL_OK")
</pallas_src>

<mosaic_0001>
module attributes {stable_mosaic.version = 11 : i64} {
  func.func @_addmargin_kernel(%arg0: i32, %arg1: memref<8x1xi32, #tpu.memory_space<vmem>>, %arg2: memref<8x64xf32, #tpu.memory_space<vmem>>, %arg3: memref<128x64xbf16, #tpu.memory_space<vmem>>, %arg4: memref<8x128xf32, #tpu.memory_space<vmem>>) attributes {dimension_semantics = [#tpu.dimension_semantics<parallel>], iteration_bounds = array<i64: 2>, scalar_prefetch = 0 : i64, scratch_operands = 0 : i64, tpu.core_type = #tpu.core_type<tc>, window_params = [{pipeline_mode = #tpu.pipeline_mode<synchronous>, transform_indices = @transform_0, window_bounds = array<i64: 8, 1>}, {pipeline_mode = #tpu.pipeline_mode<synchronous>, transform_indices = @transform_1, window_bounds = array<i64: 8, 64>}, {transform_indices = @transform_2, window_bounds = array<i64: 128, 64>}, {transform_indices = @transform_3, window_bounds = array<i64: 8, 128>}]} {
    %c0 = arith.constant 0 : index
    %c0_0 = arith.constant 0 : index
    %0 = vector.load %arg2[%c0, %c0_0] : memref<8x64xf32, #tpu.memory_space<vmem>>, vector<8x64xf32>
    %c0_1 = arith.constant 0 : index
    %c0_2 = arith.constant 0 : index
    %1 = vector.load %arg3[%c0_1, %c0_2] : memref<128x64xbf16, #tpu.memory_space<vmem>>, vector<128x64xbf16>
    %c0_3 = arith.constant 0 : index
    %c0_4 = arith.constant 0 : index
    %2 = vector.load %arg1[%c0_3, %c0_4] : memref<8x1xi32, #tpu.memory_space<vmem>>, vector<8x1xi32>
    %3 = arith.mulf %0, %0 : vector<8x64xf32>
    %cst = arith.constant dense<0.000000e+00> : vector<8xf32>
    %4 = vector.multi_reduction <add>, %3, %cst [1] : vector<8x64xf32> to vector<8xf32>
    %5 = vector.shape_cast %4 : vector<8xf32> to vector<8x1xf32>
    %6 = math.sqrt %5 : vector<8x1xf32>
    %cst_5 = arith.constant 9.99999996E-13 : f32
    %7 = vector.broadcast %cst_5 : f32 to vector<8x1xf32>
    %8 = arith.maximumf %6, %7 : vector<8x1xf32>
    %cst_6 = arith.constant 1.000000e+00 : f32
    %9 = vector.broadcast %cst_6 : f32 to vector<8x1xf32>
    %10 = arith.divf %9, %8 : vector<8x1xf32>
    %11 = arith.extf %1 : vector<128x64xbf16> to vector<128x64xf32>
    %cst_7 = arith.constant 1.000000e+00 : f32
    %12 = vector.broadcast %cst_7 : f32 to vector<8x64xf32>
    %13 = arith.mulf %11, %11 : vector<128x64xf32>
    %cst_8 = arith.constant dense<0.000000e+00> : vector<8x128xf32>
    %14 = tpu.matmul %12, %13, %cst_8 {dimension_numbers = #tpu.dot_dimension_numbers<[1], [1], [0], [0], [0, 0, 1, 0], [], []>} : vector<8x64xf32>, vector<128x64xf32>, vector<8x128xf32> -> vector<8x128xf32>
    %15 = vector.extract_strided_slice %14 {offsets = [0, 0], sizes = [1, 128], strides = [1, 1]} : vector<8x128xf32> to vector<1x128xf32>
    %16 = math.sqrt %15 : vector<1x128xf32>
    %cst_9 = arith.constant 9.99999996E-13 : f32
    %17 = vector.broadcast %cst_9 : f32 to vector<1x128xf32>
    %18 = arith.maximumf %16, %17 : vector<1x128xf32>
    %cst_10 = arith.constant 1.000000e+00 : f32
    %19 = vector.broadcast %cst_10 : f32 to vector<1x128xf32>
    %20 = arith.divf %19, %18 : vector<1x128xf32>
    %21 = arith.truncf %0 : vector<8x64xf32> to vector<8x64xbf16>
    %cst_11 = arith.constant dense<0.000000e+00> : vector<8x128xf32>
    %22 = tpu.matmul %21, %1, %cst_11 {dimension_numbers = #tpu.dot_dimension_numbers<[1], [1], [0], [0], [0, 0, 1, 0], [], []>} : vector<8x64xbf16>, vector<128x64xbf16>, vector<8x128xf32> -> vector<8x128xf32>
    %23 = vector.broadcast %10 : vector<8x1xf32> to vector<8x128xf32>
    %24 = arith.mulf %22, %23 : vector<8x128xf32>
    %25 = vector.broadcast %20 : vector<1x128xf32> to vector<8x128xf32>
    %26 = arith.mulf %24, %25 : vector<8x128xf32>
    %c128_i32 = arith.constant 128 : i32
    %27 = arith.muli %arg0, %c128_i32 : i32
    %28 = tpu.iota {dimensions = array<i32: 1>} : vector<8x128xi32>
    %29 = vector.broadcast %27 : i32 to vector<8x128xi32>
    %30 = arith.addi %29, %28 : vector<8x128xi32>
    %31 = vector.broadcast %2 : vector<8x1xi32> to vector<8x128xi32>
    %32 = arith.cmpi eq, %30, %31 : vector<8x128xi32>
    %cst_12 = arith.constant 5.000000e-01 : f32
    %33 = vector.broadcast %cst_12 : f32 to vector<8x128xf32>
    %34 = arith.subf %26, %33 : vector<8x128xf32>
    %35 = arith.select %32, %34, %26 : vector<8x128xi1>, vector<8x128xf32>
    %cst_13 = arith.constant 3.000000e+01 : f32
    %36 = vector.broadcast %cst_13 : f32 to vector<8x128xf32>
    %37 = arith.mulf %36, %35 : vector<8x128xf32>
    %c0_14 = arith.constant 0 : index
    %c0_15 = arith.constant 0 : index
    %38 = vector.load %arg4[%c0_14, %c0_15] : memref<8x128xf32, #tpu.memory_space<vmem>>, vector<8x128xf32>
    tpu.vector_store %arg4[%c0_14, %c0_15], %37 {strides = array<i32>} : memref<8x128xf32, #tpu.memory_space<vmem>>, vector<8x128xf32>,
    return
  }
  func.func @transform_0(%arg0: i32) -> (i32, i32) {
    %c0_i32 = arith.constant 0 : i32
    %c0_i32_0 = arith.constant 0 : i32
    %c0_i32_1 = arith.constant 0 : i32
    return %c0_i32, %c0_i32_0 : i32, i32
  }
  func.func @transform_1(%arg0: i32) -> (i32, i32) {
    %c0_i32 = arith.constant 0 : i32
    %c0_i32_0 = arith.constant 0 : i32
    %c0_i32_1 = arith.constant 0 : i32
    return %c0_i32, %c0_i32_0 : i32, i32
  }
  func.func @transform_2(%arg0: i32) -> (i32, i32) {
    %c0_i32 = arith.constant 0 : i32
    %c0_i32_0 = arith.constant 0 : i32
    return %arg0, %c0_i32 : i32, i32
  }
  func.func @transform_3(%arg0: i32) -> (i32, i32) {
    %c0_i32 = arith.constant 0 : i32
    %c0_i32_0 = arith.constant 0 : i32
    return %c0_i32, %arg0 : i32, i32
  }
}

</mosaic_0001>

<llo_original>
// kernel: tpu_custom_call.1
$region0: #{tpu_custom_call.1}
  #allocation0 [shape = 'u32[]', space=smem, size = 0x4, offset = 0x4, fixed_abs, tag = 'smem constant byte address 0x4 - core index']
  #allocation1 [shape = 'u32[144,128]{1,0:T(1,128)}', space=vmem, size = 0x12000, scoped, tag = 'internal scratch']
  %s0 = inlined_call_operand.vmem [shape: s32[8,1], index: 0, kind: input, shape index: {}]
  %s1 = inlined_call_operand.vmem [shape: f32[8,64], index: 1, kind: input, shape index: {}]
  %s2 = inlined_call_operand.vmem [shape: bf16[256,64], index: 2, kind: input, shape index: {}]
  %s3 = inlined_call_operand.hbm [shape: f32[8,256], index: 3, kind: output, shape index: {}]
  %s4 = sld [smem:[#allocation0]]
  $region45: #{tpu_custom_call.1} parent=0
    _
  %s6 = ssub.s32 1, %s4
  %s7 = scalar_select 0, %s6, %s4
  $region1: #{tpu_custom_call.1} parent=0
    #allocation2 [shape = 'u8[8192]{0}', space=vmem, size = 0x2000, scoped, tag = 'output window, operand 0']
    #allocation3 [shape = 's32[2]{0}', space=sflag, size = 0x8, scoped, tag = 'scoped memory for tpu_custom_call.1']
    %8 = vsyncpa [#allocation3], 0
    %s9 = scalar_lea.sflag [#allocation3], 1
    %10 = vsyncpa %s9, 0
    loop: start=0, step=1, limit=4
    $region2: #{tpu_custom_call.1} parent=1 // loop_pre_header
      _
    $region3: #{tpu_custom_call.1} parent=1 // loop_header
      %s12 = sphi 0, %s16
      %p13 = scmp.ge.s32.totalorder %s12, 4
      %s20 = sphi 0, %s20
      %s22 = sphi 0, %s20
      %s23 = sphi 0, %s22
      %s37 = sphi 0, %s23
      %s41 = sphi 0, %s41
      %s43 = sphi 0, %s41
      %s44 = sphi 0, %s43
      %s58 = sphi 0, %s44
      %s64 = sphi 0, %s66
      %s67 = sphi 0, %s64
      %s68 = sphi 0, %s67
      %s84 = sphi 0, %s68
      %s90 = sphi 0, %s92
      %s93 = sphi 0, %s90
      %s94 = sphi 0, %s93
      %s110 = sphi 0, %s94
    $region4: #{tpu_custom_call.1} parent=1 // loop_header_branch
      %15 = sbr.rel (%p13) target = $region8
    $region5: #{tpu_custom_call.1} parent=1 // loop_body
      %s17 = ssub.s32 %s12, 1
      %s18 = ssub.s32 %s12, 2
      %s19 = sadd.s32 %s12, 1
      %s21 = sadd.s32 %s20, 1
      %p24 = scmp.eq.s32.totalorder %s12, 1
      %p25 = scmp.ne.s32.totalorder %s20, %s22
      %p26 = scmp.eq.s32.totalorder %s12, 0
      %p27 = por %p25, %p26
      %p28 = scmp.ne.s32.totalorder %s20, %s22
      %p29 = scmp.eq.s32.totalorder %s17, 1
      %p30 = por %p28, %p29
      %p31 = scmp.ne.s32.totalorder %s22, %s23
      %p32 = scmp.eq.s32.totalorder %s17, 0
      %p33 = por %p31, %p32
      %p34 = scmp.ne.s32.totalorder %s22, %s23
      %p35 = scmp.eq.s32.totalorder %s18, 1
      %p36 = por %p34, %p35
      %p38 = scmp.ne.s32.totalorder %s23, %s37
      %p39 = scmp.eq.s32.totalorder %s18, 0
      %p40 = por %p38, %p39
      %s42 = sadd.s32 %s41, 1
      %p45 = scmp.eq.s32.totalorder %s12, 1
      %p46 = scmp.ne.s32.totalorder %s41, %s43
      %p47 = scmp.eq.s32.totalorder %s12, 0
      %p48 = por %p46, %p47
      %p49 = scmp.ne.s32.totalorder %s41, %s43
      %p50 = scmp.eq.s32.totalorder %s17, 1
      %p51 = por %p49, %p50
      %p52 = scmp.ne.s32.totalorder %s43, %s44
      %p53 = scmp.eq.s32.totalorder %s17, 0
      %p54 = por %p52, %p53
      %p55 = scmp.ne.s32.totalorder %s43, %s44
      %p56 = scmp.eq.s32.totalorder %s18, 1
      %p57 = por %p55, %p56
      %p59 = scmp.ne.s32.totalorder %s44, %s58
      %p60 = scmp.eq.s32.totalorder %s18, 0
      %p61 = por %p59, %p60
      %s62 = ssub.s32 %s12, %s19
      %p63 = scmp.eq.s32.totalorder %s62, 0
      %s65 = sadd.s32 %s64, 1
      %s66 = scalar_select %p63, %s64, %s65
      %p69 = pneg %p63
      %p70 = scmp.eq.s32.totalorder %s12, 1
      %p71 = por %p69, %p70
      %p72 = scmp.ne.s32.totalorder %s64, %s67
      %p73 = scmp.eq.s32.totalorder %s12, 0
      %p74 = por %p72, %p73
      %p75 = scmp.ne.s32.totalorder %s64, %s67
      %p76 = scmp.eq.s32.totalorder %s17, 1
      %p77 = por %p75, %p76
      %p78 = scmp.ne.s32.totalorder %s67, %s68
      %p79 = scmp.eq.s32.totalorder %s17, 0
      %p80 = por %p78, %p79
      %p81 = scmp.ne.s32.totalorder %s67, %s68
      %p82 = scmp.eq.s32.totalorder %s18, 1
      %p83 = por %p81, %p82
      %p85 = scmp.ne.s32.totalorder %s68, %s84
      %p86 = scmp.eq.s32.totalorder %s18, 0
      %p87 = por %p85, %p86
      %s88 = ssub.s32 %s12, %s19
      %p89 = scmp.eq.s32.totalorder %s88, 0
      %s91 = sadd.s32 %s90, 1
      %s92 = scalar_select %p89, %s90, %s91
      %p95 = pneg %p89
      %p96 = scmp.eq.s32.totalorder %s12, 1
      %p97 = por %p95, %p96
      %p98 = scmp.ne.s32.totalorder %s90, %s93
      %p99 = scmp.eq.s32.totalorder %s12, 0
      %p100 = por %p98, %p99
      %p101 = scmp.ne.s32.totalorder %s90, %s93
      %p102 = scmp.eq.s32.totalorder %s17, 1
      %p103 = por %p101, %p102
      %p104 = scmp.ne.s32.totalorder %s93, %s94
      %p105 = scmp.eq.s32.totalorder %s17, 0
      %p106 = por %p104, %p105
      %p107 = scmp.ne.s32.totalorder %s93, %s94
      %p108 = scmp.eq.s32.totalorder %s18, 1
      %p109 = por %p107, %p108
      %p111 = scmp.ne.s32.totalorder %s94, %s110
      %p112 = scmp.eq.s32.totalorder %s18, 0
      %p113 = por %p111, %p112
      %p114 = scmp.le.s32.totalorder 1, %s12
      %p115 = scmp.lt.s32.totalorder %s12, 3
      %p116 = pnand %p114, %p115
      %p117 = pneg %p116
      // Predicated region
      $region9: #{tpu_custom_call.1} parent=5 // pred_check
        _
      $region10: #{tpu_custom_call.1} parent=5 // pred_check_branch
        %119 = sbr.rel (%p116) target = $region12
      $region11: #{tpu_custom_call.1} parent=5 // pred_region
        %s120 = ssub.s32 %s12, 1
        // Predicated region
        $region13: #{tpu_custom_call.1} parent=11 // pred_check
          %p121 = pneg %p33
        $region14: #{tpu_custom_call.1} parent=11 // pred_check_branch
          %123 = sbr.rel (%p121) target = $region16
        $region15: #{tpu_custom_call.1} parent=11 // pred_region
          _
        $region16: #{tpu_custom_call.1} parent=11 // pred_fallthru
          _
        // Predicated region
        $region17: #{tpu_custom_call.1} parent=11 // pred_check
          %p124 = pneg %p54
        $region18: #{tpu_custom_call.1} parent=11 // pred_check_branch
          %126 = sbr.rel (%p124) target = $region20
        $region19: #{tpu_custom_call.1} parent=11 // pred_region
          _
        $region20: #{tpu_custom_call.1} parent=11 // pred_fallthru
          _
      $region12: #{tpu_custom_call.1} parent=5 // pred_fallthru
        _
      %p127 = scmp.lt.s32.totalorder %s12, 2
      // Predicated region
      $region21: #{tpu_custom_call.1} parent=5 // pred_check
        %p128 = pneg %p127
      $region22: #{tpu_custom_call.1} parent=5 // pred_check_branch
        %130 = sbr.rel (%p128) target = $region24
      $region23: #{tpu_custom_call.1} parent=5 // pred_region
        // Predicated region
        $region25: #{tpu_custom_call.1} parent=23 // pred_check
          %p131 = pneg %p74
        $region26: #{tpu_custom_call.1} parent=23 // pred_check_branch
          %133 = sbr.rel (%p131) target = $region28
        $region27: #{tpu_custom_call.1} parent=23 // pred_region
          %s134 = smul.u32 16, %s12
          %p135 = scmp.lt.s32.totalorder %s134, 31
          %s136 = scalar_select %p135, %s134, 31
          %s137 = smul.addr %s136, 4
          %s138 = scalar_lea.vmem %s2, %s137
          %s139 = smul.u32 16, %s12
        $region28: #{tpu_custom_call.1} parent=23 // pred_fallthru
          _
      $region24: #{tpu_custom_call.1} parent=5 // pred_fallthru
        _
      %p140 = scmp.le.s32.totalorder 1, %s12
      %p141 = scmp.lt.s32.totalorder %s12, 3
      %p142 = pnand %p140, %p141
      %p143 = pneg %p142
      // Predicated region
      $region29: #{tpu_custom_call.1} parent=5 // pred_check
        _
      $region30: #{tpu_custom_call.1} parent=5 // pred_check_branch
        %145 = sbr.rel (%p142) target = $region32
      $region31: #{tpu_custom_call.1} parent=5 // pred_region
        %s146 = ssub.s32 %s12, 1
        %p147 = pneg %p33
        %p148 = pneg %p30
        %p149 = pneg %p54
        %p150 = pneg %p51
        %s151 = smul.u32 16, %s17
        %p152 = scmp.lt.s32.totalorder %s151, 31
        %s153 = scalar_select %p152, %s151, 31
        %s154 = smul.addr %s153, 4
        %s155 = scalar_lea.vmem %s2, %s154
        %p156 = pneg %p80
        %p157 = pneg %p77
        %p158 = pneg %p106
        %p159 = pneg %p103
        %s160 = sand.u32 %s93, 1
        %s161 = scalar_lea.sflag [#allocation3], %s160
        %s162 = sand.u32 %s93, 1
        %s163 = smul.addr %s162, 8
        %s164 = scalar_lea.vmem [#allocation2], %s163
        %s165 = smul.u32 16, %s17
        %p166 = scmp.lt.s32.totalorder %s165, 31
        %s167 = scalar_select %p166, %s165, 31
        %s168 = smul.addr %s167, 4
        %s169 = scalar_lea.vmem %s2, %s168
        %s170 = smul.u32 16, %s17
        %v172 = vld [vmem:[%s1] sm:$0xff]
        %v173 = vld [vmem:[%s169] sm:$0xf]
        %v174 = vld [vmem:[%s169 + $0x4] sm:$0xf]
        %v175 = vld [vmem:[%s169 + $0x8] sm:$0xf]
        %v176 = vld [vmem:[%s169 + $0xc] sm:$0xf]
        %v177 = vld [vmem:[%s169 + $0x10] sm:$0xf]
        %v178 = vld [vmem:[%s169 + $0x14] sm:$0xf]
        %v179 = vld [vmem:[%s169 + $0x18] sm:$0xf]
        %v180 = vld [vmem:[%s169 + $0x1c] sm:$0xf]
        %v181 = vld [vmem:[%s169 + $0x20] sm:$0xf]
        %v182 = vld [vmem:[%s169 + $0x24] sm:$0xf]
        %v183 = vld [vmem:[%s169 + $0x28] sm:$0xf]
        %v184 = vld [vmem:[%s169 + $0x2c] sm:$0xf]
        %v185 = vld [vmem:[%s169 + $0x30] sm:$0xf]
        %v186 = vld [vmem:[%s169 + $0x34] sm:$0xf]
        %v187 = vld [vmem:[%s169 + $0x38] sm:$0xf]
        %v188 = vld [vmem:[%s169 + $0x3c] sm:$0xf]
        %v189 = vld [vmem:[%s0] sm:$0xff]
        %v190 = vmul.f32 %v172, %v172
        %vm191 = vcmask 523264
        %v192 = vsel %vm191, %v190, 0.0
        %193 = vadd.xlane.f32.xlu0 %v192
        %v194 = vpop.xlane.xlu0 %193
        %v195 = vrsqrt.pop %v194
        %v196 = vmul.f32 %v194, %v195
        %vm197 = vcmp.eq.f32.partialorder %v194, inf
        %v198 = vsel %vm197, %v194, %v196
        %vm199 = vcmp.eq.f32.partialorder %v194, 0.0
        %v200 = vand.u32 %v194, 2147483648
        %v201 = vsel %vm199, %v200, %v198
        %v202 = vmax.f32 %v201, 1e-12
        %v203 = vrcp.pop %v202
        %v204 = vmul.f32 1.0, %v203
        %v205 = vunpack.c.l.bf16 %v173
        %v206 = vunpack.c.l.bf16 %v174
        %v207 = vunpack.c.l.bf16 %v175
        %v208 = vunpack.c.l.bf16 %v176
        %v209 = vunpack.c.l.bf16 %v177
        %v210 = vunpack.c.l.bf16 %v178
        %v211 = vunpack.c.l.bf16 %v179
        %v212 = vunpack.c.l.bf16 %v180
        %v213 = vunpack.c.l.bf16 %v181
        %v214 = vunpack.c.l.bf16 %v182
        %v215 = vunpack.c.l.bf16 %v183
        %v216 = vunpack.c.l.bf16 %v184
        %v217 = vunpack.c.l.bf16 %v185
        %v218 = vunpack.c.l.bf16 %v186
        %v219 = vunpack.c.l.bf16 %v187
        %v220 = vunpack.c.l.bf16 %v188
        %v221 = vmul.f32 %v205, %v205
        %v222 = vmul.f32 %v206, %v206
        %v223 = vmul.f32 %v207, %v207
        %v224 = vmul.f32 %v208, %v208
        %v225 = vmul.f32 %v209, %v209
        %v226 = vmul.f32 %v210, %v210
        %v227 = vmul.f32 %v211, %v211
        %v228 = vmul.f32 %v212, %v212
        %v229 = vmul.f32 %v213, %v213
        %v230 = vmul.f32 %v214, %v214
        %v231 = vmul.f32 %v215, %v215
        %v232 = vmul.f32 %v216, %v216
        %v233 = vmul.f32 %v217, %v217
        %v234 = vmul.f32 %v218, %v218
        %v235 = vmul.f32 %v219, %v219
        %v236 = vmul.f32 %v220, %v220
        %v238 = vsel %vm191, 1.0, 0
        %v241 = vsel %vm191, %v221, 0
        %v244 = vsel %vm191, %v222, 0
        %v247 = vsel %vm191, %v223, 0
        %v250 = vsel %vm191, %v224, 0
        %v253 = vsel %vm191, %v225, 0
        %v256 = vsel %vm191, %v226, 0
        %v259 = vsel %vm191, %v227, 0
        %v262 = vsel %vm191, %v228, 0
        %v265 = vsel %vm191, %v229, 0
        %v268 = vsel %vm191, %v230, 0
        %v271 = vsel %vm191, %v231, 0
        %v274 = vsel %vm191, %v232, 0
        %v277 = vsel %vm191, %v233, 0
        %v280 = vsel %vm191, %v234, 0
        %v283 = vsel %vm191, %v235, 0
        %v286 = vsel %vm191, %v236, 0
        %288 = vmatprep.subr.mxu0 0.0
        %289 = vmatpush1.xpose.msra.mxu0 %v241
        %290 = vmatprep.subr.mxu0 0.0
        %291 = vmatpush1.xpose.msra.mxu0 %v244
        %292 = vmatprep.subr.mxu0 0.0
        %293 = vmatpush1.xpose.msra.mxu0 %v247
        %294 = vmatprep.subr.mxu0 0.0
        %295 = vmatpush1.xpose.msra.mxu0 %v250
        %296 = vmatprep.subr.mxu0 0.0
        %297 = vmatpush1.xpose.msra.mxu0 %v253
        %298 = vmatprep.subr.mxu0 0.0
        %299 = vmatpush1.xpose.msra.mxu0 %v256
        %300 = vmatprep.subr.mxu0 0.0
        %301 = vmatpush1.xpose.msra.mxu0 %v259
        %302 = vmatprep.subr.mxu0 0.0
        %303 = vmatpush1.xpose.msra.mxu0 %v262
        %304 = vmatprep.subr.mxu0 0.0
        %305 = vmatpush1.xpose.msra.mxu0 %v265
        %306 = vmatprep.subr.mxu0 0.0
        %307 = vmatpush1.xpose.msra.mxu0 %v268
        %308 = vmatprep.subr.mxu0 0.0
        %309 = vmatpush1.xpose.msra.mxu0 %v271
        %310 = vmatprep.subr.mxu0 0.0
        %311 = vmatpush1.xpose.msra.mxu0 %v274
        %312 = vmatprep.subr.mxu0 0.0
        %313 = vmatpush1.xpose.msra.mxu0 %v277
        %314 = vmatprep.subr.mxu0 0.0
        %315 = vmatpush1.xpose.msra.mxu0 %v280
        %316 = vmatprep.subr.mxu0 0.0
        %317 = vmatpush1.xpose.msra.mxu0 %v283
        %318 = vmatprep.subr.mxu0 0.0
        %319 = vmatpush1.xpose.msra.mxu0 %v286
        %320 = vmatprep.subr.mxu0 0.0
        %321 = vmatpush1.xpose.msra.mxu0 0.0
        %322 = vmatprep.subr.mxu0 0.0
        %323 = vmatpush1.xpose.msra.mxu0 0.0
        %324 = vmatprep.subr.mxu0 0.0
        %325 = vmatpush1.xpose.msra.mxu0 0.0
        %326 = vmatprep.subr.mxu0 0.0
        %327 = vmatpush1.xpose.msra.mxu0 0.0
        %328 = vmatprep.subr.mxu0 0.0
        %329 = vmatpush1.xpose.msra.mxu0 0.0
        %330 = vmatprep.subr.mxu0 0.0
        %331 = vmatpush1.xpose.msra.mxu0 0.0
        %332 = vmatprep.subr.mxu0 0.0
        %333 = vmatpush1.xpose.msra.mxu0 0.0
        %334 = vmatprep.subr.mxu0 0.0
        %335 = vmatpush1.xpose.msra.mxu0 0.0
        %336 = vmatprep.subr.mxu0 0.0
        %337 = vmatpush1.xpose.msra.mxu0 0.0
        %338 = vmatprep.subr.mxu0 0.0
        %339 = vmatpush1.xpose.msra.mxu0 0.0
        %340 = vmatprep.subr.mxu0 0.0
        %341 = vmatpush1.xpose.msra.mxu0 0.0
        %342 = vmatprep.subr.mxu0 0.0
        %343 = vmatpush1.xpose.msra.mxu0 0.0
        %344 = vmatprep.subr.mxu0 0.0
        %345 = vmatpush1.xpose.msra.mxu0 0.0
        %346 = vmatprep.subr.mxu0 0.0
        %347 = vmatpush1.xpose.msra.mxu0 0.0
        %348 = vmatprep.subr.mxu0 0.0
        %349 = vmatpush1.xpose.msra.mxu0 0.0
        %350 = vmatprep.subr.mxu0 0.0
        %351 = vmatpush1.xpose.msra.mxu0 0.0
        %352 = vmatprep.mubr.f32.mxu0 0.0
        %353 = vmatmul.mubr.f32.gmra.mrb[0].mxu0 %v238
        %v354 = vpop.f32.mrb[0].mxu0
        %v355 = vadd.f32 0.0, %v354
        %v356 = vpop.f32.mrb[0].mxu0
        %357 = vdwg.mxu0
        %v358 = vrsqrt.pop %v355
        %v359 = vmul.f32 %v355, %v358
        %vm360 = vcmp.eq.f32.partialorder %v355, inf
        %v361 = vsel %vm360, %v355, %v359
        %vm362 = vcmp.eq.f32.partialorder %v355, 0.0
        %v363 = vand.u32 %v355, 2147483648
        %v364 = vsel %vm362, %v363, %v361
        %v365 = vmax.f32 %v364, 1e-12
        %v366 = vrcp.pop %v365
        %v367 = vmul.f32 1.0, %v366
        %v368 = vpack.c.bf16 %v172, %v172
        %v385 = vunpack.c.l.b16 %v173
        %v386 = vunpack.c.l.b16 %v174
        %v387 = vunpack.c.l.b16 %v175
        %v388 = vunpack.c.l.b16 %v176
        %v389 = vunpack.c.l.b16 %v177
        %v390 = vunpack.c.l.b16 %v178
        %v391 = vunpack.c.l.b16 %v179
        %v392 = vunpack.c.l.b16 %v180
        %v393 = vunpack.c.l.b16 %v181
        %v394 = vunpack.c.l.b16 %v182
        %v395 = vunpack.c.l.b16 %v183
        %v396 = vunpack.c.l.b16 %v184
        %v397 = vunpack.c.l.b16 %v185
        %v398 = vunpack.c.l.b16 %v186
        %v399 = vunpack.c.l.b16 %v187
        %v400 = vunpack.c.l.b16 %v188
        %v401 = vpack.c.b16 %v386, %v385
        %v402 = vpack.c.b16 %v388, %v387
        %v403 = vpack.c.b16 %v390, %v389
        %v404 = vpack.c.b16 %v392, %v391
        %v405 = vpack.c.b16 %v394, %v393
        %v406 = vpack.c.b16 %v396, %v395
        %v407 = vpack.c.b16 %v398, %v397
        %v408 = vpack.c.b16 %v400, %v399
        %v410 = vsel %vm191, %v368, 0
        %v413 = vsel %vm191, %v401, 0
        %v416 = vsel %vm191, %v402, 0
        %v419 = vsel %vm191, %v403, 0
        %v422 = vsel %vm191, %v404, 0
        %v425 = vsel %vm191, %v405, 0
        %v428 = vsel %vm191, %v406, 0
        %v431 = vsel %vm191, %v407, 0
        %v434 = vsel %vm191, %v408, 0
        %436 = vmatprep.subr.bf16.mxu0 0
        %437 = vmatpush1.bf16.xpose.msra.mxu0 %v413
        %438 = vmatprep.subr.bf16.mxu0 0
        %439 = vmatpush1.bf16.xpose.msra.mxu0 %v416
        %440 = vmatprep.subr.bf16.mxu0 0
        %441 = vmatpush1.bf16.xpose.msra.mxu0 %v419
        %442 = vmatprep.subr.bf16.mxu0 0
        %443 = vmatpush1.bf16.xpose.msra.mxu0 %v422
        %444 = vmatprep.subr.bf16.mxu0 0
        %445 = vmatpush1.bf16.xpose.msra.mxu0 %v425
        %446 = vmatprep.subr.bf16.mxu0 0
        %447 = vmatpush1.bf16.xpose.msra.mxu0 %v428
        %448 = vmatprep.subr.bf16.mxu0 0
        %449 = vmatpush1.bf16.xpose.msra.mxu0 %v431
        %450 = vmatprep.subr.bf16.mxu0 0
        %451 = vmatpush1.bf16.xpose.msra.mxu0 %v434
        %452 = vmatprep.subr.bf16.mxu0 0
        %453 = vmatpush1.bf16.xpose.msra.mxu0 0
        %454 = vmatprep.subr.bf16.mxu0 0
        %455 = vmatpush1.bf16.xpose.msra.mxu0 0
        %456 = vmatprep.subr.bf16.mxu0 0
        %457 = vmatpush1.bf16.xpose.msra.mxu0 0
        %458 = vmatprep.subr.bf16.mxu0 0
        %459 = vmatpush1.bf16.xpose.msra.mxu0 0
        %460 = vmatprep.subr.bf16.mxu0 0
        %461 = vmatpush1.bf16.xpose.msra.mxu0 0
        %462 = vmatprep.subr.bf16.mxu0 0
        %463 = vmatpush1.bf16.xpose.msra.mxu0 0
        %464 = vmatprep.subr.bf16.mxu0 0
        %465 = vmatpush1.bf16.xpose.msra.mxu0 0
        %466 = vmatprep.subr.bf16.mxu0 0
        %467 = vmatpush1.bf16.xpose.msra.mxu0 0
        %468 = vmatprep.mubr.bf16.mxu0 0
        %469 = vmatmul.mubr.bf16.gmra.mrb[0].mxu0 %v410
        %v470 = vpop.f32.mrb[0].mxu0
        %v471 = vadd.f32 0.0, %v470
        %v472 = vpop.f32.mrb[0].mxu0
        %v473 = vpop.f32.mrb[0].mxu0
        %v474 = vpop.f32.mrb[0].mxu0
        %475 = vdwg.mxu0
        %v476 = vmul.f32 %v471, %v204
        %v477 = vlaneseq
        %v478 = vshrl.u32 %v477, 7
        %v479 = vsub.s32 0, %v478
        %v480 = vrot.slane %v367, %v479
        %v481 = vmul.f32 %v476, %v480
        %s482 = smul.u32 %s17, 128
        %v483 = vlaneseq
        %v484 = vand.u32 %v483, 127
        %v485 = vstv %s482
        %v486 = vadd.s32 %v485, %v484
        %487 = vset.pattern.permute.xlu0 0
        %488 = vperm.xlu0 %487, %v189
        %v489 = vpop.permute.xlu0 %488
        %vm490 = vcmp.eq.s32.totalorder %v486, %v489
        %v491 = vsub.f32 %v481, 0.5
        %v492 = vsel %vm490, %v491, %v481
        %v493 = vmul.f32 %v492, 30.0
        %494 = vst [vmem:[%s164] sm:$0xff] %v493
        %s495 = sand.u32 %s93, 1
        %s496 = scalar_lea.sflag [#allocation3], %s495
        %s497 = sand.u32 %s93, 1
        %s498 = smul.addr %s497, 8
        %s499 = scalar_lea.vmem [#allocation2], %s498
        // Predicated region
        $region33: #{tpu_custom_call.1} parent=31 // pred_check
          %p500 = pneg %p103
        $region34: #{tpu_custom_call.1} parent=31 // pred_check_branch
          %502 = sbr.rel (%p500) target = $region36
        $region35: #{tpu_custom_call.1} parent=31 // pred_region
          %s504 = ssub.s32 128, 128
          %505 = vsyncadd %s496, %s504
          %s506 = smul.addr %s17, 128
          %s507 = scalar_lea.hbm %s3, %s506
          %s509 = sshll.u32 %s499, 4
          %s510 = int_to_ptr.vmem [resolvable:$true] %s509
          %512 = dma.vmem_to_hbm [thread:$0]  %s510, 128, %s507, %s496
        $region36: #{tpu_custom_call.1} parent=31 // pred_fallthru
          _
      $region32: #{tpu_custom_call.1} parent=5 // pred_fallthru
        _
      %p513 = scmp.le.s32.totalorder 2, %s12
      // Predicated region
      $region37: #{tpu_custom_call.1} parent=5 // pred_check
        %p514 = pneg %p513
      $region38: #{tpu_custom_call.1} parent=5 // pred_check_branch
        %516 = sbr.rel (%p514) target = $region40
      $region39: #{tpu_custom_call.1} parent=5 // pred_region
        %s517 = ssub.s32 %s12, 2
        // Predicated region
        $region41: #{tpu_custom_call.1} parent=39 // pred_check
          %p518 = pneg %p109
        $region42: #{tpu_custom_call.1} parent=39 // pred_check_branch
          %520 = sbr.rel (%p518) target = $region44
        $region43: #{tpu_custom_call.1} parent=39 // pred_region
          %s521 = sand.u32 %s94, 1
          %s522 = scalar_lea.sflag [#allocation3], %s521
          %s523 = sand.u32 %s94, 1
          %s524 = smul.addr %s523, 8
          %s525 = scalar_lea.vmem [#allocation2], %s524
          %526 = dma.done %s522, 128
        $region44: #{tpu_custom_call.1} parent=39 // pred_fallthru
          _
      $region40: #{tpu_custom_call.1} parent=5 // pred_fallthru
        _
    $region6: #{tpu_custom_call.1} parent=1 // loop_footer
      %s16 = sadd.s32 1, %s12
    $region7: #{tpu_custom_call.1} parent=1 // loop_footer_branch
      %11 = sbr.rel target = $region3
    $region8: #{tpu_custom_call.1} parent=1 // loop_exit
      _
    %527 = vsyncpa [#allocation3], 1
    %s528 = scalar_lea.sflag [#allocation3], 1
    %529 = vsyncpa %s528, 1

</llo_original>
